<compile_context>
chip_gen: v5e
topology: v5e:2x2
jax: 0.10.0
libtpu: 0.0.40
codegen_flags: <defaults>
</compile_context>

<pallas_src>
import math
import numpy as np
import jax
import jax.numpy as jnp
from jax.experimental import pallas as pl
from jax.experimental.pallas import tpu as pltpu


def _round_up_128(v):
    return ((int(v) + 127) // 128) * 128


def _pick_tp(hw, bs, cap=2048):
    """Lane-aligned (multiple-of-128) spatial tile size for HW = ny*nx."""
    tp = _round_up_128(hw)
    if tp <= cap:
        # v7x has 2 TensorCores sharded over the "parallel" grid axes: make
        # sure small levels with bs == 1 still produce >= 2 grid steps.
        if bs == 1 and hw > 128:
            tp = _round_up_128((hw + 1) // 2)
        return tp
    # Prefer an exact multiple-of-128 divisor near the cap (no tail padding),
    # e.g. HW=6400 -> tp=1280 (grid 5) instead of a padded 2048-tail.
    for cand in range(cap, cap // 2, -128):
        if hw % cand == 0:
            return cand
    return cap


def _make_detect_kernel(stride, nx, tp, compute_dtype, need_raw):
    stride = float(stride)
    nxf = float(nx)
    inv_nx = 1.0 / nxf  # host-baked reciprocal; floor((p+0.5)*inv_nx) is exact
                        # for any realistic map size (margin 0.5/nx >> f32 err).

    def _body(x_ref, w_ref, rc_ref, dec_ref, raw_ref):
        # 1x1 conv == (N, C) @ (C, TP) on the MXU, f32 accumulate.  Cast the
        # activation tile to bf16 in VMEM (no extra HBM pass on the host side).
        x = x_ref[...].astype(compute_dtype)
        acc = jnp.dot(w_ref[...], x, preferred_element_type=jnp.float32)

        rc = rc_ref[...]                  # (N, 8) per-output-row constants (f32)
        acc = acc + rc[:, 0:1]            # + bias
        if raw_ref is not None:
            raw_ref[...] = acc.astype(raw_ref.dtype)

        sig = jax.nn.sigmoid(acc)

        # Per-lane spatial coordinates of this tile: p = tile_start + lane,
        # gx = p % nx, gy = p // nx.
        p0 = pl.program_id(1) * tp
        lane = jax.lax.broadcasted_iota(jnp.int32, (1, tp), 1) + p0
        lanef = lane.astype(jnp.float32)
        gy = jnp.floor((lanef + 0.5) * inv_nx)
        gx = lanef - gy * nxf

        # xy rows : stride * (2*sig - 0.5 + g)   (scale=2*stride, cx/cy=stride, c0=-0.5*stride)
        # wh rows : (2*sig)^2 * anchor           (whc=4*anchor)
        # rest    : sig                          (scale=1)
        offset = rc[:, 3:4] * gx + rc[:, 4:5] * gy + rc[:, 5:6]
        dec_ref[...] = sig * rc[:, 1:2] + (sig * sig) * rc[:, 2:3] + offset

    if need_raw:
        def kernel(x_ref, w_ref, rc_ref, dec_ref, raw_ref):
            _body(x_ref, w_ref, rc_ref, dec_ref, raw_ref)
    else:
        def kernel(x_ref, w_ref, rc_ref, dec_ref):
            _body(x_ref, w_ref, rc_ref, dec_ref, None)
    return kernel


def _detect_layer_pallas(x3, w, rowc, stride, nx, *, need_raw,
                         raw_dtype=jnp.float32, compute_dtype=jnp.bfloat16,
                         tp_cap=2048):
    """x3: (bs, C, HW) activations (any float dtype); w: (N, C) bf16; rowc: (N, 8) f32.
    Returns (dec, raw_or_None), each (bs, N, HW)."""
    bs, C, HW = x3.shape
    N = w.shape[0]

    x_bytes = jnp.dtype(x3.dtype).itemsize
    w_bytes = jnp.dtype(w.dtype).itemsize
    out_bytes = 4 + (jnp.dtype(raw_dtype).itemsize if need_raw else 0)

    tp = _pick_tp(HW, bs, tp_cap)
    # Re-derive VMEM budget per call; keep double-buffered blocks <= ~36 MiB so
    # the scoped limit stays well inside v7x's 64 MiB physical VMEM.
    while tp > 256 and 2 * (C * tp * x_bytes + N * tp * out_bytes) > 36 * 2**20:
        tp -= 128
    n_tiles = pl.cdiv(HW, tp)
    grid = (bs, n_tiles)

    per_step = C * tp * x_bytes + N * tp * out_bytes
    resident = N * C * w_bytes + N * 8 * 4
    vmem_limit = int(min(40 * 2**20,
                         max(16 * 2**20, 2 * per_step + 2 * resident + (2 << 20))))

    kernel = _make_detect_kernel(stride, nx, tp, compute_dtype, need_raw)

    out_shape = [jax.ShapeDtypeStruct((bs, N, HW), jnp.float32)]
    out_specs = [pl.BlockSpec((None, N, tp), lambda b, t: (b, 0, t))]
    if need_raw:
        out_shape.append(jax.ShapeDtypeStruct((bs, N, HW), raw_dtype))
        out_specs.append(pl.BlockSpec((None, N, tp), lambda b, t: (b, 0, t)))

    cost = pl.CostEstimate(
        flops=2 * bs * N * C * HW + 12 * bs * N * HW,
        transcendentals=bs * N * HW,
        bytes_accessed=bs * C * HW * x_bytes + resident + bs * N * HW * out_bytes,
    )

    outs = pl.pallas_call(
        kernel,
        out_shape=tuple(out_shape),
        grid_spec=pltpu.PrefetchScalarGridSpec(
            num_scalar_prefetch=0,
            grid=grid,
            in_specs=[
                pl.BlockSpec((None, C, tp), lambda b, t: (b, 0, t)),   # activations tile
                pl.BlockSpec((N, C), lambda b, t: (0, 0)),             # weight (resident)
                pl.BlockSpec((N, 8), lambda b, t: (0, 0)),             # per-row constants
            ],
            out_specs=tuple(out_specs),
        ),
        compiler_params=pltpu.CompilerParams(
            dimension_semantics=("parallel", "parallel"),
            vmem_limit_bytes=vmem_limit,
        ),
        cost_estimate=cost,
    )(x3, w, rowc)

    dec = outs[0]
    raw = outs[1] if need_raw else None
    return dec, raw


def detect_forward(xs, weights, biases, anchors, strides, nc, *,
                   need_x=True, compute_dtype=jnp.bfloat16,
                   raw_dtype=jnp.float32, tp_cap=2048):
    """Inference-mode forward of Detect (training=False).

    xs[i]:      (bs, ch[i], ny, nx) NCHW feature maps (f32 or bf16)
    weights[i]: (na*no, ch[i])  (PyTorch 1x1 conv weight, squeezed)
    biases[i]:  (na*no,)
    anchors:    (nl, na, 2)
    Returns (z_cat, x_list) matching PyTorch: z_cat (bs, sum(na*ny*nx), no);
    x_list[i] (bs, na, ny, nx, no) raw conv outputs, or None if need_x=False
    (pure-inference fast path: no raw HBM write, no relayout pass).
    """
    anchors_np = np.asarray(anchors, dtype=np.float32)
    nl, na = anchors_np.shape[0], anchors_np.shape[1]
    no = nc + 5
    N = na * no

    # Per-output-channel (row) constants, baked on host once. Row r = a*no + k.
    k_idx = np.arange(N) % no
    a_idx = np.arange(N) // no
    is_x = (k_idx == 0).astype(np.float32)
    is_y = (k_idx == 1).astype(np.float32)
    mxy = is_x + is_y
    mwh = ((k_idx == 2) | (k_idx == 3)).astype(np.float32)

    z = []
    outs = [] if need_x else None
    for i in range(nl):
        x = xs[i]
        bs, C, ny, nx = x.shape
        hw = ny * nx
        stride = float(strides[i])

        anc_row = np.where(mwh > 0,
                           anchors_np[i][a_idx, np.clip(k_idx - 2, 0, 1)],
                           0.0).astype(np.float32)
        rowc = np.zeros((N, 8), np.float32)
        rowc[:, 0] = np.asarray(biases[i], dtype=np.float32)       # bias
        rowc[:, 1] = 2.0 * stride * mxy + (1.0 - mxy - mwh)        # sigmoid scale
        rowc[:, 2] = 4.0 * anc_row                                 # 4*anchor (wh rows)
        rowc[:, 3] = is_x * stride                                 # gx coefficient
        rowc[:, 4] = is_y * stride                                 # gy coefficient
        rowc[:, 5] = -0.5 * stride * mxy                           # constant offset

        # NCHW -> (bs, C, ny*nx): metadata-only (no host astype / extra HBM pass;
        # the bf16 cast happens on the tile inside the kernel).
        x3 = x.reshape(bs, C, hw)
        w = jnp.asarray(weights[i]).astype(compute_dtype)

        dec, raw = _detect_layer_pallas(x3, w, jnp.asarray(rowc), stride, nx,
                                        need_raw=need_x, raw_dtype=raw_dtype,
                                        compute_dtype=compute_dtype, tp_cap=tp_cap)

        # Plain-JAX glue back to the exact PyTorch layouts.
        # TODO(synk): downstream consumers could use the kernel-native
        # (bs, na*no, ny*nx) layout directly and skip these relayout passes.
        z.append(dec.reshape(bs, na, no, hw).transpose(0, 1, 3, 2)
                    .reshape(bs, na * hw, no))
        if need_x:
            outs.append(raw.reshape(bs, na, no, ny, nx).transpose(0, 1, 3, 4, 2))

    return jnp.concatenate(z, axis=1), outs


def _reference_forward(xs, weights, biases, anchors, strides, nc,
                       compute_dtype=jnp.bfloat16):
    """Pure-jnp reference mirroring the PyTorch module (inference mode),
    using the same bf16-input / f32-accumulate conv as the kernel."""
    nl, na = anchors.shape[0], anchors.shape[1]
    no = nc + 5
    z, outs = [], []
    for i in range(nl):
        x = xs[i]
        bs, C, ny, nx = x.shape
        conv = jnp.einsum("bchw,oc->bohw",
                          x.astype(compute_dtype), weights[i].astype(compute_dtype),
                          preferred_element_type=jnp.float32)
        conv = conv + biases[i][None, :, None, None]
        xi = conv.reshape(bs, na, no, ny, nx).transpose(0, 1, 3, 4, 2)
        outs.append(xi)
        yv, xv = jnp.meshgrid(jnp.arange(ny), jnp.arange(nx), indexing="ij")
        grid = jnp.stack((xv, yv), axis=2).reshape(1, 1, ny, nx, 2).astype(jnp.float32)
        y = jax.nn.sigmoid(xi)
        xy = (y[..., 0:2] * 2.0 - 0.5 + grid) * strides[i]
        wh = (y[..., 2:4] * 2.0) ** 2 * anchors[i].reshape(1, na, 1, 1, 2)
        y = jnp.concatenate([xy, wh, y[..., 4:]], axis=-1)
        z.append(y.reshape(bs, -1, no))
    return jnp.concatenate(z, axis=1), outs


if __name__ == "__main__":
    key = jax.random.PRNGKey(0)

    # Small synthetic Detect config
    nc = 3
    no = nc + 5                       # 8
    anchors_cfg = ((10, 13, 16, 30, 33, 23),
                   (30, 61, 62, 45, 59, 119))
    nl = len(anchors_cfg)
    na = len(anchors_cfg[0]) // 2     # 3
    anchors = jnp.asarray(anchors_cfg, dtype=jnp.float32).reshape(nl, na, 2)
    strides = [8.0, 16.0]
    ch = (4, 8)
    bs = 2
    spatial = [(16, 16), (8, 8)]      # (ny, nx) per level

    # Deterministic parameter + input init
    keys = jax.random.split(key, 3 * nl)
    weights, biases, xs = [], [], []
    for i in range(nl):
        C = ch[i]
        kw, kb, kx = keys[3 * i], keys[3 * i + 1], keys[3 * i + 2]
        bound = 1.0 / math.sqrt(C)    # 1x1 conv fan-in
        weights.append(jax.random.uniform(kw, (na * no, C), jnp.float32,
                                          minval=-bound, maxval=bound))
        biases.append(jax.random.uniform(kb, (na * no,), jnp.float32,
                                         minval=-bound, maxval=bound))
        ny, nx = spatial[i]
        xs.append(jax.random.normal(kx, (bs, C, ny, nx), jnp.float32))

    # Full-semantics path (returns z and x_list, like the PyTorch module).
    z_cat, x_out = detect_forward(xs, weights, biases, anchors, strides, nc)
    jax.block_until_ready(z_cat)
    for xo in x_out:
        jax.block_until_ready(xo)

    # Pure-inference fast path (drops the raw output entirely).
    z_fast, x_none = detect_forward(xs, weights, biases, anchors, strides, nc,
                                    need_x=False)
    jax.block_until_ready(z_fast)
    assert x_none is None

    # Sanity check against a pure-JAX reference of the PyTorch semantics.
    z_ref, x_ref = _reference_forward(xs, weights, biases, anchors, strides, nc)
    np.testing.assert_allclose(np.asarray(z_cat), np.asarray(z_ref),
                               rtol=5e-4, atol=1e-3)
    np.testing.assert_allclose(np.asarray(z_fast), np.asarray(z_ref),
                               rtol=5e-4, atol=1e-3)
    for a, b in zip(x_out, x_ref):
        np.testing.assert_allclose(np.asarray(a), np.asarray(b),
                                   rtol=5e-4, atol=1e-3)

    assert z_cat.shape == (bs, sum(na * ny * nx for ny, nx in spatial), no)
    for (ny, nx), xo in zip(spatial, x_out):
        assert xo.shape == (bs, na, ny, nx, no)
    print("KERNEL_OK")
</pallas_src>

<mosaic_0001>
module attributes {stable_mosaic.version = 11 : i64} {
  func.func @kernel(%arg0: i32, %arg1: i32, %arg2: memref<1x4x256xf32, #tpu.memory_space<vmem>>, %arg3: memref<24x4xbf16, #tpu.memory_space<vmem>>, %arg4: memref<24x8xf32, #tpu.memory_space<vmem>>, %arg5: memref<1x24x256xf32, #tpu.memory_space<vmem>>, %arg6: memref<1x24x256xf32, #tpu.memory_space<vmem>>) attributes {dimension_semantics = [#tpu.dimension_semantics<parallel>, #tpu.dimension_semantics<parallel>], iteration_bounds = array<i64: 2, 1>, scalar_prefetch = 0 : i64, scratch_operands = 0 : i64, tpu.core_type = #tpu.core_type<tc>, window_params = [{transform_indices = @transform_0, window_bounds = array<i64: 1, 4, 256>}, {pipeline_mode = #tpu.pipeline_mode<synchronous>, transform_indices = @transform_1, window_bounds = array<i64: 24, 4>}, {pipeline_mode = #tpu.pipeline_mode<synchronous>, transform_indices = @transform_2, window_bounds = array<i64: 24, 8>}, {transform_indices = @transform_3, window_bounds = array<i64: 1, 24, 256>}, {transform_indices = @transform_4, window_bounds = array<i64: 1, 24, 256>}]} {
    %c0 = arith.constant 0 : index
    %c0_0 = arith.constant 0 : index
    %c0_1 = arith.constant 0 : index
    %0 = vector.load %arg2[%c0, %c0_0, %c0_1] : memref<1x4x256xf32, #tpu.memory_space<vmem>>, vector<1x4x256xf32>
    %1 = vector.shape_cast %0 : vector<1x4x256xf32> to vector<4x256xf32>
    %2 = arith.truncf %1 : vector<4x256xf32> to vector<4x256xbf16>
    %c0_2 = arith.constant 0 : index
    %c0_3 = arith.constant 0 : index
    %3 = vector.load %arg3[%c0_2, %c0_3] : memref<24x4xbf16, #tpu.memory_space<vmem>>, vector<24x4xbf16>
    %cst = arith.constant dense<0.000000e+00> : vector<24x256xf32>
    %4 = tpu.matmul %3, %2, %cst {dimension_numbers = #tpu.dot_dimension_numbers<[1], [0], [0], [1], [0, 0, 1, 1], [], []>} : vector<24x4xbf16>, vector<4x256xbf16>, vector<24x256xf32> -> vector<24x256xf32>
    %c0_4 = arith.constant 0 : index
    %c0_5 = arith.constant 0 : index
    %5 = vector.load %arg4[%c0_4, %c0_5] : memref<24x8xf32, #tpu.memory_space<vmem>>, vector<24x8xf32>
    %6 = vector.extract_strided_slice %5 {offsets = [0, 0], sizes = [24, 1], strides = [1, 1]} : vector<24x8xf32> to vector<24x1xf32>
    %7 = vector.broadcast %6 : vector<24x1xf32> to vector<24x256xf32>
    %8 = arith.addf %4, %7 : vector<24x256xf32>
    %c0_6 = arith.constant 0 : index
    %c0_7 = arith.constant 0 : index
    %c0_8 = arith.constant 0 : index
    %9 = vector.load %arg6[%c0_6, %c0_7, %c0_8] : memref<1x24x256xf32, #tpu.memory_space<vmem>>, vector<1x24x256xf32>
    %10 = vector.shape_cast %9 : vector<1x24x256xf32> to vector<24x256xf32>
    %11 = vector.shape_cast %8 : vector<24x256xf32> to vector<1x24x256xf32>
    tpu.vector_store %arg6[%c0_6, %c0_7, %c0_8], %11 {strides = array<i32>} : memref<1x24x256xf32, #tpu.memory_space<vmem>>, vector<1x24x256xf32>,
    %12 = arith.negf %8 : vector<24x256xf32>
    %13 = math.exp %12 : vector<24x256xf32>
    %cst_9 = arith.constant 1.000000e+00 : f32
    %14 = vector.broadcast %cst_9 : f32 to vector<24x256xf32>
    %15 = arith.addf %14, %13 : vector<24x256xf32>
    %16 = arith.divf %14, %15 : vector<24x256xf32>
    %c256_i32 = arith.constant 256 : i32
    %17 = arith.muli %arg1, %c256_i32 : i32
    %18 = tpu.iota {dimensions = array<i32: 1>} : vector<1x256xi32>
    %19 = vector.broadcast %17 : i32 to vector<1x256xi32>
    %20 = arith.addi %18, %19 : vector<1x256xi32>
    %21 = arith.sitofp %20 : vector<1x256xi32> to vector<1x256xf32>
    %cst_10 = arith.constant 5.000000e-01 : f32
    %22 = vector.broadcast %cst_10 : f32 to vector<1x256xf32>
    %23 = arith.addf %21, %22 : vector<1x256xf32>
    %cst_11 = arith.constant 6.250000e-02 : f32
    %24 = vector.broadcast %cst_11 : f32 to vector<1x256xf32>
    %25 = arith.mulf %23, %24 : vector<1x256xf32>
    %26 = math.floor %25 : vector<1x256xf32>
    %cst_12 = arith.constant 1.600000e+01 : f32
    %27 = vector.broadcast %cst_12 : f32 to vector<1x256xf32>
    %28 = arith.mulf %26, %27 : vector<1x256xf32>
    %29 = arith.subf %21, %28 : vector<1x256xf32>
    %30 = vector.extract_strided_slice %5 {offsets = [0, 3], sizes = [24, 1], strides = [1, 1]} : vector<24x8xf32> to vector<24x1xf32>
    %31 = vector.broadcast %30 : vector<24x1xf32> to vector<24x256xf32>
    %32 = vector.broadcast %29 : vector<1x256xf32> to vector<24x256xf32>
    %33 = arith.mulf %31, %32 : vector<24x256xf32>
    %34 = vector.extract_strided_slice %5 {offsets = [0, 4], sizes = [24, 1], strides = [1, 1]} : vector<24x8xf32> to vector<24x1xf32>
    %35 = vector.broadcast %34 : vector<24x1xf32> to vector<24x256xf32>
    %36 = vector.broadcast %26 : vector<1x256xf32> to vector<24x256xf32>
    %37 = arith.mulf %35, %36 : vector<24x256xf32>
    %38 = arith.addf %33, %37 : vector<24x256xf32>
    %39 = vector.extract_strided_slice %5 {offsets = [0, 5], sizes = [24, 1], strides = [1, 1]} : vector<24x8xf32> to vector<24x1xf32>
    %40 = vector.broadcast %39 : vector<24x1xf32> to vector<24x256xf32>
    %41 = arith.addf %38, %40 : vector<24x256xf32>
    %42 = vector.extract_strided_slice %5 {offsets = [0, 1], sizes = [24, 1], strides = [1, 1]} : vector<24x8xf32> to vector<24x1xf32>
    %43 = vector.broadcast %42 : vector<24x1xf32> to vector<24x256xf32>
    %44 = arith.mulf %16, %43 : vector<24x256xf32>
    %45 = arith.mulf %16, %16 : vector<24x256xf32>
    %46 = vector.extract_strided_slice %5 {offsets = [0, 2], sizes = [24, 1], strides = [1, 1]} : vector<24x8xf32> to vector<24x1xf32>
    %47 = vector.broadcast %46 : vector<24x1xf32> to vector<24x256xf32>
    %48 = arith.mulf %45, %47 : vector<24x256xf32>
    %49 = arith.addf %44, %48 : vector<24x256xf32>
    %50 = arith.addf %49, %41 : vector<24x256xf32>
    %c0_13 = arith.constant 0 : index
    %c0_14 = arith.constant 0 : index
    %c0_15 = arith.constant 0 : index
    %51 = vector.load %arg5[%c0_13, %c0_14, %c0_15] : memref<1x24x256xf32, #tpu.memory_space<vmem>>, vector<1x24x256xf32>
    %52 = vector.shape_cast %51 : vector<1x24x256xf32> to vector<24x256xf32>
    %53 = vector.shape_cast %50 : vector<24x256xf32> to vector<1x24x256xf32>
    tpu.vector_store %arg5[%c0_13, %c0_14, %c0_15], %53 {strides = array<i32>} : memref<1x24x256xf32, #tpu.memory_space<vmem>>, vector<1x24x256xf32>,
    return
  }
  func.func @transform_0(%arg0: i32, %arg1: i32) -> (i32, i32, i32) {
    %c0_i32 = arith.constant 0 : i32
    %c0_i32_0 = arith.constant 0 : i32
    return %arg0, %c0_i32, %arg1 : i32, i32, i32
  }
  func.func @transform_1(%arg0: i32, %arg1: i32) -> (i32, i32) {
    %c0_i32 = arith.constant 0 : i32
    %c0_i32_0 = arith.constant 0 : i32
    %c0_i32_1 = arith.constant 0 : i32
    return %c0_i32, %c0_i32_0 : i32, i32
  }
  func.func @transform_2(%arg0: i32, %arg1: i32) -> (i32, i32) {
    %c0_i32 = arith.constant 0 : i32
    %c0_i32_0 = arith.constant 0 : i32
    %c0_i32_1 = arith.constant 0 : i32
    return %c0_i32, %c0_i32_0 : i32, i32
  }
  func.func @transform_3(%arg0: i32, %arg1: i32) -> (i32, i32, i32) {
    %c0_i32 = arith.constant 0 : i32
    %c0_i32_0 = arith.constant 0 : i32
    return %arg0, %c0_i32, %arg1 : i32, i32, i32
  }
  func.func @transform_4(%arg0: i32, %arg1: i32) -> (i32, i32, i32) {
    %c0_i32 = arith.constant 0 : i32
    %c0_i32_0 = arith.constant 0 : i32
    return %arg0, %c0_i32, %arg1 : i32, i32, i32
  }
}

</mosaic_0001>

<llo_original>
// kernel: tpu_custom_call.1
$region0: #{tpu_custom_call.1}
  #allocation0 [shape = 'u32[]', space=smem, size = 0x4, offset = 0x4, fixed_abs, tag = 'smem constant byte address 0x4 - core index']
  #allocation1 [shape = 'u32[72,128]{1,0:T(1,128)}', space=vmem, size = 0x9000, scoped, tag = 'internal scratch']
  %s0 = inlined_call_operand.vmem [shape: f32[2,4,256], index: 0, kind: input, shape index: {}]
  %s1 = inlined_call_operand.vmem [shape: bf16[24,4], index: 1, kind: input, shape index: {}]
  %s2 = inlined_call_operand.vmem [shape: f32[24,8], index: 2, kind: input, shape index: {}]
  %s3 = inlined_call_operand.hbm [shape: f32[2,24,256], index: 3, kind: output, shape index: {0}]
  %s4 = inlined_call_operand.hbm [shape: f32[2,24,256], index: 4, kind: output, shape index: {1}]
  %5 = xla_tuple %s3, %s4
  %s6 = sld [smem:[#allocation0]]
  $region53: #{tpu_custom_call.1} parent=0
    _
  %s8 = ssub.s32 1, %s6
  %s9 = scalar_select 0, %s8, %s6
  $region1: #{tpu_custom_call.1} parent=0
    #allocation2 [shape = 'u8[49152]{0}', space=vmem, size = 0xc000, scoped, tag = 'output window, operand 0']
    #allocation3 [shape = 's32[2]{0}', space=sflag, size = 0x8, scoped, tag = 'scoped memory for tpu_custom_call.1']
    #allocation4 [shape = 'u8[49152]{0}', space=vmem, size = 0xc000, scoped, tag = 'output window, operand 1']
    #allocation5 [shape = 's32[2]{0}', space=sflag, size = 0x8, scoped, tag = 'scoped memory for tpu_custom_call.1']
    %10 = vsyncpa [#allocation3], 0
    %s11 = scalar_lea.sflag [#allocation3], 1
    %12 = vsyncpa %s11, 0
    %13 = vsyncpa [#allocation5], 0
    %s14 = scalar_lea.sflag [#allocation5], 1
    %15 = vsyncpa %s14, 0
    loop: start=0, step=1, limit=4
    $region2: #{tpu_custom_call.1} parent=1 // loop_pre_header
      _
    $region3: #{tpu_custom_call.1} parent=1 // loop_header
      %s17 = sphi 0, %s21
      %p18 = scmp.ge.s32.totalorder %s17, 4
      %s24 = sphi 0, %s36
      %s25 = sphi 0, %s32
      %s26 = sphi 0, %s24
      %s27 = sphi 0, %s25
      %s28 = sphi 0, %s26
      %s29 = sphi 0, %s27
      %s41 = sphi 0, %s43
      %s44 = sphi 0, %s41
      %s45 = sphi 0, %s44
      %s61 = sphi 0, %s45
      %s65 = sphi 0, %s65
      %s67 = sphi 0, %s65
      %s68 = sphi 0, %s67
      %s82 = sphi 0, %s68
      %s86 = sphi 0, %s86
      %s88 = sphi 0, %s86
      %s89 = sphi 0, %s88
      %s103 = sphi 0, %s89
      %s111 = sphi 0, %s113
      %s114 = sphi 0, %s111
      %s115 = sphi 0, %s114
      %s131 = sphi 0, %s115
      %s139 = sphi 0, %s141
      %s142 = sphi 0, %s139
      %s143 = sphi 0, %s142
      %s159 = sphi 0, %s143
    $region4: #{tpu_custom_call.1} parent=1 // loop_header_branch
      %20 = sbr.rel (%p18) target = $region8
    $region5: #{tpu_custom_call.1} parent=1 // loop_body
      %s22 = ssub.s32 %s17, 1
      %s23 = ssub.s32 %s17, 2
      %s30 = sadd.s32 1, %s25
      %p31 = scmp.ge.s32.totalorder %s30, 1
      %s32 = scalar_select %p31, 0, %s30
      %s33 = sadd.s32 1, %s24
      %s34 = scalar_select %p31, %s33, %s24
      %p35 = scmp.ge.s32.totalorder %s34, 2
      %s36 = scalar_select %p35, 0, %s34
      %s37 = ssub.s32 %s24, %s36
      %s38 = ssub.s32 %s25, %s32
      %s39 = sor.u32 %s37, %s38
      %p40 = scmp.eq.s32.totalorder %s39, 0
      %s42 = sadd.s32 %s41, 1
      %s43 = scalar_select %p40, %s41, %s42
      %p46 = pneg %p40
      %p47 = scmp.eq.s32.totalorder %s17, 1
      %p48 = por %p46, %p47
      %p49 = scmp.ne.s32.totalorder %s41, %s44
      %p50 = scmp.eq.s32.totalorder %s17, 0
      %p51 = por %p49, %p50
      %p52 = scmp.ne.s32.totalorder %s41, %s44
      %p53 = scmp.eq.s32.totalorder %s22, 1
      %p54 = por %p52, %p53
      %p55 = scmp.ne.s32.totalorder %s44, %s45
      %p56 = scmp.eq.s32.totalorder %s22, 0
      %p57 = por %p55, %p56
      %p58 = scmp.ne.s32.totalorder %s44, %s45
      %p59 = scmp.eq.s32.totalorder %s23, 1
      %p60 = por %p58, %p59
      %p62 = scmp.ne.s32.totalorder %s45, %s61
      %p63 = scmp.eq.s32.totalorder %s23, 0
      %p64 = por %p62, %p63
      %s66 = sadd.s32 %s65, 1
      %p69 = scmp.eq.s32.totalorder %s17, 1
      %p70 = scmp.ne.s32.totalorder %s65, %s67
      %p71 = scmp.eq.s32.totalorder %s17, 0
      %p72 = por %p70, %p71
      %p73 = scmp.ne.s32.totalorder %s65, %s67
      %p74 = scmp.eq.s32.totalorder %s22, 1
      %p75 = por %p73, %p74
      %p76 = scmp.ne.s32.totalorder %s67, %s68
      %p77 = scmp.eq.s32.totalorder %s22, 0
      %p78 = por %p76, %p77
      %p79 = scmp.ne.s32.totalorder %s67, %s68
      %p80 = scmp.eq.s32.totalorder %s23, 1
      %p81 = por %p79, %p80
      %p83 = scmp.ne.s32.totalorder %s68, %s82
      %p84 = scmp.eq.s32.totalorder %s23, 0
      %p85 = por %p83, %p84
      %s87 = sadd.s32 %s86, 1
      %p90 = scmp.eq.s32.totalorder %s17, 1
      %p91 = scmp.ne.s32.totalorder %s86, %s88
      %p92 = scmp.eq.s32.totalorder %s17, 0
      %p93 = por %p91, %p92
      %p94 = scmp.ne.s32.totalorder %s86, %s88
      %p95 = scmp.eq.s32.totalorder %s22, 1
      %p96 = por %p94, %p95
      %p97 = scmp.ne.s32.totalorder %s88, %s89
      %p98 = scmp.eq.s32.totalorder %s22, 0
      %p99 = por %p97, %p98
      %p100 = scmp.ne.s32.totalorder %s88, %s89
      %p101 = scmp.eq.s32.totalorder %s23, 1
      %p102 = por %p100, %p101
      %p104 = scmp.ne.s32.totalorder %s89, %s103
      %p105 = scmp.eq.s32.totalorder %s23, 0
      %p106 = por %p104, %p105
      %s107 = ssub.s32 %s24, %s36
      %s108 = ssub.s32 %s25, %s32
      %s109 = sor.u32 %s107, %s108
      %p110 = scmp.eq.s32.totalorder %s109, 0
      %s112 = sadd.s32 %s111, 1
      %s113 = scalar_select %p110, %s111, %s112
      %p116 = pneg %p110
      %p117 = scmp.eq.s32.totalorder %s17, 1
      %p118 = por %p116, %p117
      %p119 = scmp.ne.s32.totalorder %s111, %s114
      %p120 = scmp.eq.s32.totalorder %s17, 0
      %p121 = por %p119, %p120
      %p122 = scmp.ne.s32.totalorder %s111, %s114
      %p123 = scmp.eq.s32.totalorder %s22, 1
      %p124 = por %p122, %p123
      %p125 = scmp.ne.s32.totalorder %s114, %s115
      %p126 = scmp.eq.s32.totalorder %s22, 0
      %p127 = por %p125, %p126
      %p128 = scmp.ne.s32.totalorder %s114, %s115
      %p129 = scmp.eq.s32.totalorder %s23, 1
      %p130 = por %p128, %p129
      %p132 = scmp.ne.s32.totalorder %s115, %s131
      %p133 = scmp.eq.s32.totalorder %s23, 0
      %p134 = por %p132, %p133
      %s135 = ssub.s32 %s24, %s36
      %s136 = ssub.s32 %s25, %s32
      %s137 = sor.u32 %s135, %s136
      %p138 = scmp.eq.s32.totalorder %s137, 0
      %s140 = sadd.s32 %s139, 1
      %s141 = scalar_select %p138, %s139, %s140
      %p144 = pneg %p138
      %p145 = scmp.eq.s32.totalorder %s17, 1
      %p146 = por %p144, %p145
      %p147 = scmp.ne.s32.totalorder %s139, %s142
      %p148 = scmp.eq.s32.totalorder %s17, 0
      %p149 = por %p147, %p148
      %p150 = scmp.ne.s32.totalorder %s139, %s142
      %p151 = scmp.eq.s32.totalorder %s22, 1
      %p152 = por %p150, %p151
      %p153 = scmp.ne.s32.totalorder %s142, %s143
      %p154 = scmp.eq.s32.totalorder %s22, 0
      %p155 = por %p153, %p154
      %p156 = scmp.ne.s32.totalorder %s142, %s143
      %p157 = scmp.eq.s32.totalorder %s23, 1
      %p158 = por %p156, %p157
      %p160 = scmp.ne.s32.totalorder %s143, %s159
      %p161 = scmp.eq.s32.totalorder %s23, 0
      %p162 = por %p160, %p161
      %p163 = scmp.le.s32.totalorder 1, %s17
      %p164 = scmp.lt.s32.totalorder %s17, 3
      %p165 = pnand %p163, %p164
      %p166 = pneg %p165
      // Predicated region
      $region9: #{tpu_custom_call.1} parent=5 // pred_check
        _
      $region10: #{tpu_custom_call.1} parent=5 // pred_check_branch
        %168 = sbr.rel (%p165) target = $region12
      $region11: #{tpu_custom_call.1} parent=5 // pred_region
        %s169 = ssub.s32 %s17, 1
        // Predicated region
        $region13: #{tpu_custom_call.1} parent=11 // pred_check
          %p170 = pneg %p78
        $region14: #{tpu_custom_call.1} parent=11 // pred_check_branch
          %172 = sbr.rel (%p170) target = $region16
        $region15: #{tpu_custom_call.1} parent=11 // pred_region
          _
        $region16: #{tpu_custom_call.1} parent=11 // pred_fallthru
          _
        // Predicated region
        $region17: #{tpu_custom_call.1} parent=11 // pred_check
          %p173 = pneg %p99
        $region18: #{tpu_custom_call.1} parent=11 // pred_check_branch
          %175 = sbr.rel (%p173) target = $region20
        $region19: #{tpu_custom_call.1} parent=11 // pred_region
          _
        $region20: #{tpu_custom_call.1} parent=11 // pred_fallthru
          _
      $region12: #{tpu_custom_call.1} parent=5 // pred_fallthru
        _
      %p176 = scmp.lt.s32.totalorder %s17, 2
      // Predicated region
      $region21: #{tpu_custom_call.1} parent=5 // pred_check
        %p177 = pneg %p176
      $region22: #{tpu_custom_call.1} parent=5 // pred_check_branch
        %179 = sbr.rel (%p177) target = $region24
      $region23: #{tpu_custom_call.1} parent=5 // pred_region
        // Predicated region
        $region25: #{tpu_custom_call.1} parent=23 // pred_check
          %p180 = pneg %p51
        $region26: #{tpu_custom_call.1} parent=23 // pred_check_branch
          %182 = sbr.rel (%p180) target = $region28
        $region27: #{tpu_custom_call.1} parent=23 // pred_region
          %s183 = smul.u32 2, %s25
          %p184 = scmp.lt.s32.totalorder %s24, 1
          %s185 = scalar_select %p184, %s24, 1
          %p186 = scmp.lt.s32.totalorder %s183, 1
          %s187 = scalar_select %p186, %s183, 1
          %s188 = smul.addr %s185, 2
          %s189 = sadd.s32 %s187, %s188
          %s190 = smul.addr %s189, 4
          %s191 = scalar_lea.vmem %s0, %s190
          %s192 = smul.u32 2, %s25
        $region28: #{tpu_custom_call.1} parent=23 // pred_fallthru
          _
      $region24: #{tpu_custom_call.1} parent=5 // pred_fallthru
        _
      %p193 = scmp.le.s32.totalorder 1, %s17
      %p194 = scmp.lt.s32.totalorder %s17, 3
      %p195 = pnand %p193, %p194
      %p196 = pneg %p195
      // Predicated region
      $region29: #{tpu_custom_call.1} parent=5 // pred_check
        _
      $region30: #{tpu_custom_call.1} parent=5 // pred_check_branch
        %198 = sbr.rel (%p195) target = $region32
      $region31: #{tpu_custom_call.1} parent=5 // pred_region
        %s199 = ssub.s32 %s17, 1
        %s200 = smul.u32 2, %s27
        %p201 = scmp.lt.s32.totalorder %s26, 1
        %s202 = scalar_select %p201, %s26, 1
        %p203 = scmp.lt.s32.totalorder %s200, 1
        %s204 = scalar_select %p203, %s200, 1
        %s205 = smul.addr %s202, 2
        %s206 = sadd.s32 %s204, %s205
        %s207 = smul.addr %s206, 4
        %s208 = scalar_lea.vmem %s0, %s207
        %p209 = pneg %p57
        %p210 = pneg %p54
        %p211 = pneg %p78
        %p212 = pneg %p75
        %p213 = pneg %p99
        %p214 = pneg %p96
        %p215 = pneg %p127
        %p216 = pneg %p124
        %s217 = sand.u32 %s114, 1
        %s218 = scalar_lea.sflag [#allocation3], %s217
        %s219 = sand.u32 %s114, 1
        %s220 = smul.addr %s219, 48
        %s221 = scalar_lea.vmem [#allocation2], %s220
        %p222 = pneg %p155
        %p223 = pneg %p152
        %s224 = sand.u32 %s142, 1
        %s225 = scalar_lea.sflag [#allocation5], %s224
        %s226 = sand.u32 %s142, 1
        %s227 = smul.addr %s226, 48
        %s228 = scalar_lea.vmem [#allocation4], %s227
        %s229 = smul.u32 2, %s27
        %p230 = scmp.lt.s32.totalorder %s26, 1
        %s231 = scalar_select %p230, %s26, 1
        %p232 = scmp.lt.s32.totalorder %s229, 1
        %s233 = scalar_select %p232, %s229, 1
        %s234 = smul.addr %s231, 2
        %s235 = sadd.s32 %s233, %s234
        %s236 = smul.addr %s235, 4
        %s237 = scalar_lea.vmem %s0, %s236
        %s238 = smul.u32 2, %s27
        %s239 = smul.u32 2, %s27
        %s240 = smul.u32 2, %s27
        %v242 = vld [vmem:[%s237] sm:$0xff]
        %244 = vst [vmem:[#allocation1] ss:$2 sm:$0xff] %v242
        %v245 = vld.sshfl [vmem:[#allocation1] sm:$0xff pattern:$0x75316420]
        %v246 = vld.sshfl [vmem:[#allocation1 + $0x8] sm:$0xff pattern:$0x75316420]
        %v249 = vpack.c.bf16 %v245, %v245
        %v250 = vpack.c.bf16 %v246, %v246
        %v251 = vld [vmem:[%s1] sm:$0xf]
        %v252 = vld [vmem:[%s1 + $0x4] sm:$0xf]
        %v253 = vld [vmem:[%s1 + $0x8] sm:$0xf]
        %v254 = vld [vmem:[%s2] sm:$0xff]
        %v255 = vld [vmem:[%s2 + $0x8] sm:$0xff]
        %v256 = vld [vmem:[%s2 + $0x10] sm:$0xff]
        %258 = vset.pattern.permute.xlu0 0
        %259 = vperm.xlu0 %258, %v254
        %v260 = vpop.permute.xlu0 %259
        %263 = vset.pattern.permute.xlu0 0
        %264 = vperm.xlu0 %263, %v255
        %v265 = vpop.permute.xlu0 %264
        %268 = vset.pattern.permute.xlu0 0
        %269 = vperm.xlu0 %268, %v256
        %v270 = vpop.permute.xlu0 %269
        %v275 = vunpack.c.l.b16 %v251
        %v276 = vunpack.c.l.b16 %v252
        %v277 = vunpack.c.l.b16 %v253
        %v278 = vpack.c.b16 %v276, %v275
        %v279 = vpack.c.b16 %v277, %v277
        %vm280 = vcmask 31744
        %v282 = vsel %vm280, %v278, 0
        %v285 = vsel %vm280, %v279, 0
        %vm287 = vcmask 1041408
        %v289 = vsel %vm287, %v249, 0
        %v292 = vsel %vm287, %v250, 0
        %294 = vmatpush.bf16.msra.mxu0 0
        %295 = vmatpush.bf16.msra.mxu0 0
        %296 = vmatpush.bf16.msra.mxu0 0
        %297 = vmatpush.bf16.msra.mxu0 0
        %298 = vmatpush.bf16.msra.mxu0 0
        %299 = vmatpush.bf16.msra.mxu0 0
        %300 = vmatpush.bf16.msra.mxu0 0
        %301 = vmatpush.bf16.msra.mxu0 %v289
        %302 = vmatmul.bf16.gmra.mxu0 %v282
        %v303 = vpop.f32.mrf.mxu0
        %v304 = vadd.f32 %v260, %v303
        %v305 = vpop.f32.mrf.mxu0
        %v306 = vadd.f32 %v265, %v305
        %307 = vmatmul.bf16.gmra.mxu0 %v285
        %v308 = vpop.f32.mrf.mxu0
        %v309 = vadd.f32 %v270, %v308
        %v310 = vpop.f32.mrf.mxu0
        %311 = vdwg.mxu0
        %312 = vmatpush.bf16.msra.mxu0 0
        %313 = vmatpush.bf16.msra.mxu0 0
        %314 = vmatpush.bf16.msra.mxu0 0
        %315 = vmatpush.bf16.msra.mxu0 0
        %316 = vmatpush.bf16.msra.mxu0 0
        %317 = vmatpush.bf16.msra.mxu0 0
        %318 = vmatpush.bf16.msra.mxu0 0
        %319 = vmatpush.bf16.msra.mxu0 %v292
        %320 = vmatmul.bf16.gmra.mxu0 %v282
        %v321 = vpop.f32.mrf.mxu0
        %v322 = vadd.f32 %v260, %v321
        %v323 = vpop.f32.mrf.mxu0
        %v324 = vadd.f32 %v265, %v323
        %325 = vmatmul.bf16.gmra.mxu0 %v285
        %v326 = vpop.f32.mrf.mxu0
        %v327 = vadd.f32 %v270, %v326
        %v328 = vpop.f32.mrf.mxu0
        %329 = vdwg.mxu0
        %330 = vst [vmem:[%s228] sm:$0xff] %v304
        %331 = vst [vmem:[%s228 + $0x8] sm:$0xff] %v322
        %332 = vst [vmem:[%s228 + $0x10] sm:$0xff] %v306
        %333 = vst [vmem:[%s228 + $0x18] sm:$0xff] %v324
        %334 = vst [vmem:[%s228 + $0x20] sm:$0xff] %v309
        %335 = vst [vmem:[%s228 + $0x28] sm:$0xff] %v327
        %v336 = vxor.u32 %v304, 2147483648
        %v337 = vxor.u32 %v322, 2147483648
        %v338 = vxor.u32 %v306, 2147483648
        %v339 = vxor.u32 %v324, 2147483648
        %v340 = vxor.u32 %v309, 2147483648
        %v341 = vxor.u32 %v327, 2147483648
        %v342 = vmul.f32 %v336, 1.442695
        %v343 = vpow.pop %v342
        %v344 = vmul.f32 %v337, 1.442695
        %v345 = vpow.pop %v344
        %v346 = vmul.f32 %v338, 1.442695
        %v347 = vpow.pop %v346
        %v348 = vmul.f32 %v339, 1.442695
        %v349 = vpow.pop %v348
        %v350 = vmul.f32 %v340, 1.442695
        %v351 = vpow.pop %v350
        %v352 = vmul.f32 %v341, 1.442695
        %v353 = vpow.pop %v352
        %v354 = vadd.f32 %v343, 1.0
        %v355 = vadd.f32 %v345, 1.0
        %v356 = vadd.f32 %v347, 1.0
        %v357 = vadd.f32 %v349, 1.0
        %v358 = vadd.f32 %v351, 1.0
        %v359 = vadd.f32 %v353, 1.0
        %v360 = vrcp.pop %v354
        %v361 = vmul.f32 %v354, %v360
        %v362 = vsub.f32 1.0, %v361
        %v363 = vmul.f32 %v360, %v362
        %v364 = vadd.f32 %v360, %v363
        %vm365 = vweird.f32 %v354
        %vm366 = vweird.f32 %v360
        %vm367 = vmor %vm365, %vm366
        %v368 = vsel %vm367, %v360, %v364
        %v369 = vand.u32 2147483647, %v354
        %vm370 = vcmp.eq.f32.partialorder %v369, 8.507059e+37
        %v371 = vand.u32 %v354, 2147483648
        %v372 = vor.u32 1.1754944e-38, %v371
        %v373 = vsel %vm370, %v372, %v368
        %v374 = vmul.f32 1.0, %v373
        %v375 = vrcp.pop %v355
        %v376 = vmul.f32 %v355, %v375
        %v377 = vsub.f32 1.0, %v376
        %v378 = vmul.f32 %v375, %v377
        %v379 = vadd.f32 %v375, %v378
        %vm380 = vweird.f32 %v355
        %vm381 = vweird.f32 %v375
        %vm382 = vmor %vm380, %vm381
        %v383 = vsel %vm382, %v375, %v379
        %v384 = vand.u32 2147483647, %v355
        %vm385 = vcmp.eq.f32.partialorder %v384, 8.507059e+37
        %v386 = vand.u32 %v355, 2147483648
        %v387 = vor.u32 1.1754944e-38, %v386
        %v388 = vsel %vm385, %v387, %v383
        %v389 = vmul.f32 1.0, %v388
        %v390 = vrcp.pop %v356
        %v391 = vmul.f32 %v356, %v390
        %v392 = vsub.f32 1.0, %v391
        %v393 = vmul.f32 %v390, %v392
        %v394 = vadd.f32 %v390, %v393
        %vm395 = vweird.f32 %v356
        %vm396 = vweird.f32 %v390
        %vm397 = vmor %vm395, %vm396
        %v398 = vsel %vm397, %v390, %v394
        %v399 = vand.u32 2147483647, %v356
        %vm400 = vcmp.eq.f32.partialorder %v399, 8.507059e+37
        %v401 = vand.u32 %v356, 2147483648
        %v402 = vor.u32 1.1754944e-38, %v401
        %v403 = vsel %vm400, %v402, %v398
        %v404 = vmul.f32 1.0, %v403
        %v405 = vrcp.pop %v357
        %v406 = vmul.f32 %v357, %v405
        %v407 = vsub.f32 1.0, %v406
        %v408 = vmul.f32 %v405, %v407
        %v409 = vadd.f32 %v405, %v408
        %vm410 = vweird.f32 %v357
        %vm411 = vweird.f32 %v405
        %vm412 = vmor %vm410, %vm411
        %v413 = vsel %vm412, %v405, %v409
        %v414 = vand.u32 2147483647, %v357
        %vm415 = vcmp.eq.f32.partialorder %v414, 8.507059e+37
        %v416 = vand.u32 %v357, 2147483648
        %v417 = vor.u32 1.1754944e-38, %v416
        %v418 = vsel %vm415, %v417, %v413
        %v419 = vmul.f32 1.0, %v418
        %v420 = vrcp.pop %v358
        %v421 = vmul.f32 %v358, %v420
        %v422 = vsub.f32 1.0, %v421
        %v423 = vmul.f32 %v420, %v422
        %v424 = vadd.f32 %v420, %v423
        %vm425 = vweird.f32 %v358
        %vm426 = vweird.f32 %v420
        %vm427 = vmor %vm425, %vm426
        %v428 = vsel %vm427, %v420, %v424
        %v429 = vand.u32 2147483647, %v358
        %vm430 = vcmp.eq.f32.partialorder %v429, 8.507059e+37
        %v431 = vand.u32 %v358, 2147483648
        %v432 = vor.u32 1.1754944e-38, %v431
        %v433 = vsel %vm430, %v432, %v428
        %v434 = vmul.f32 1.0, %v433
        %v435 = vrcp.pop %v359
        %v436 = vmul.f32 %v359, %v435
        %v437 = vsub.f32 1.0, %v436
        %v438 = vmul.f32 %v435, %v437
        %v439 = vadd.f32 %v435, %v438
        %vm440 = vweird.f32 %v359
        %vm441 = vweird.f32 %v435
        %vm442 = vmor %vm440, %vm441
        %v443 = vsel %vm442, %v435, %v439
        %v444 = vand.u32 2147483647, %v359
        %vm445 = vcmp.eq.f32.partialorder %v444, 8.507059e+37
        %v446 = vand.u32 %v359, 2147483648
        %v447 = vor.u32 1.1754944e-38, %v446
        %v448 = vsel %vm445, %v447, %v443
        %v449 = vmul.f32 1.0, %v448
        %s450 = smul.u32 %s27, 256
        %v451 = vlaneseq
        %v452 = vand.u32 %v451, 127
        %v453 = vadd.s32 %v452, 128
        %v454 = vstv %s450
        %v455 = vadd.s32 %v452, %v454
        %v456 = vadd.s32 %v453, %v454
        %v457 = vcvt.s32.f32 %v455
        %v458 = vcvt.s32.f32 %v456
        %v459 = vadd.f32 %v457, 0.5
        %v460 = vadd.f32 %v458, 0.5
        %v461 = vmul.f32 %v459, 0.0625
        %v462 = vmul.f32 %v460, 0.0625
        %v463 = vfloor.f32 %v461
        %v464 = vfloor.f32 %v462
        %v465 = vmul.f32 %v463, 16.0
        %v466 = vmul.f32 %v464, 16.0
        %v467 = vsub.f32 %v457, %v465
        %v468 = vsub.f32 %v458, %v466
        %469 = vset.pattern.permute.xlu0 3
        %470 = vperm.xlu0 %469, %v254
        %v471 = vpop.permute.xlu0 %470
        %473 = vset.pattern.permute.xlu0 3
        %474 = vperm.xlu0 %473, %v255
        %v475 = vpop.permute.xlu0 %474
        %477 = vset.pattern.permute.xlu0 3
        %478 = vperm.xlu0 %477, %v256
        %v479 = vpop.permute.xlu0 %478
        %v481 = vmul.f32 %v471, %v467
        %v482 = vmul.f32 %v471, %v468
        %v483 = vmul.f32 %v475, %v467
        %v484 = vmul.f32 %v475, %v468
        %v485 = vmul.f32 %v479, %v467
        %v486 = vmul.f32 %v479, %v468
        %487 = vset.pattern.permute.xlu0 4
        %488 = vperm.xlu0 %487, %v254
        %v489 = vpop.permute.xlu0 %488
        %491 = vset.pattern.permute.xlu0 4
        %492 = vperm.xlu0 %491, %v255
        %v493 = vpop.permute.xlu0 %492
        %495 = vset.pattern.permute.xlu0 4
        %496 = vperm.xlu0 %495, %v256
        %v497 = vpop.permute.xlu0 %496
        %v499 = vmul.f32 %v489, %v463
        %v500 = vmul.f32 %v489, %v464
        %v501 = vmul.f32 %v493, %v463
        %v502 = vmul.f32 %v493, %v464
        %v503 = vmul.f32 %v497, %v463
        %v504 = vmul.f32 %v497, %v464
        %v505 = vadd.f32 %v481, %v499
        %v506 = vadd.f32 %v482, %v500
        %v507 = vadd.f32 %v483, %v501
        %v508 = vadd.f32 %v484, %v502
        %v509 = vadd.f32 %v485, %v503
        %v510 = vadd.f32 %v486, %v504
        %511 = vset.pattern.permute.xlu0 5
        %512 = vperm.xlu0 %511, %v254
        %v513 = vpop.permute.xlu0 %512
        %515 = vset.pattern.permute.xlu0 5
        %516 = vperm.xlu0 %515, %v255
        %v517 = vpop.permute.xlu0 %516
        %519 = vset.pattern.permute.xlu0 5
        %520 = vperm.xlu0 %519, %v256
        %v521 = vpop.permute.xlu0 %520
        %v523 = vadd.f32 %v505, %v513
        %v524 = vadd.f32 %v506, %v513
        %v525 = vadd.f32 %v507, %v517
        %v526 = vadd.f32 %v508, %v517
        %v527 = vadd.f32 %v509, %v521
        %v528 = vadd.f32 %v510, %v521
        %529 = vset.pattern.permute.xlu0 1
        %530 = vperm.xlu0 %529, %v254
        %v531 = vpop.permute.xlu0 %530
        %533 = vset.pattern.permute.xlu0 1
        %534 = vperm.xlu0 %533, %v255
        %v535 = vpop.permute.xlu0 %534
        %537 = vset.pattern.permute.xlu0 1
        %538 = vperm.xlu0 %537, %v256
        %v539 = vpop.permute.xlu0 %538
        %v541 = vmul.f32 %v374, %v531
        %v542 = vmul.f32 %v389, %v531
        %v543 = vmul.f32 %v404, %v535
        %v544 = vmul.f32 %v419, %v535
        %v545 = vmul.f32 %v434, %v539
        %v546 = vmul.f32 %v449, %v539
        %v547 = vmul.f32 %v374, %v374
        %v548 = vmul.f32 %v389, %v389
        %v549 = vmul.f32 %v404, %v404
        %v550 = vmul.f32 %v419, %v419
        %v551 = vmul.f32 %v434, %v434
        %v552 = vmul.f32 %v449, %v449
        %553 = vset.pattern.permute.xlu0 2
        %554 = vperm.xlu0 %553, %v254
        %v555 = vpop.permute.xlu0 %554
        %557 = vset.pattern.permute.xlu0 2
        %558 = vperm.xlu0 %557, %v255
        %v559 = vpop.permute.xlu0 %558
        %561 = vset.pattern.permute.xlu0 2
        %562 = vperm.xlu0 %561, %v256
        %v563 = vpop.permute.xlu0 %562
        %v565 = vmul.f32 %v547, %v555
        %v566 = vmul.f32 %v548, %v555
        %v567 = vmul.f32 %v549, %v559
        %v568 = vmul.f32 %v550, %v559
        %v569 = vmul.f32 %v551, %v563
        %v570 = vmul.f32 %v552, %v563
        %v571 = vadd.f32 %v541, %v565
        %v572 = vadd.f32 %v542, %v566
        %v573 = vadd.f32 %v543, %v567
        %v574 = vadd.f32 %v544, %v568
        %v575 = vadd.f32 %v545, %v569
        %v576 = vadd.f32 %v546, %v570
        %v577 = vadd.f32 %v571, %v523
        %v578 = vadd.f32 %v572, %v524
        %v579 = vadd.f32 %v573, %v525
        %v580 = vadd.f32 %v574, %v526
        %v581 = vadd.f32 %v575, %v527
        %v582 = vadd.f32 %v576, %v528
        %583 = vst [vmem:[%s221] sm:$0xff] %v577
        %584 = vst [vmem:[%s221 + $0x8] sm:$0xff] %v578
        %585 = vst [vmem:[%s221 + $0x10] sm:$0xff] %v579
        %586 = vst [vmem:[%s221 + $0x18] sm:$0xff] %v580
        %587 = vst [vmem:[%s221 + $0x20] sm:$0xff] %v581
        %588 = vst [vmem:[%s221 + $0x28] sm:$0xff] %v582
        %s589 = sand.u32 %s114, 1
        %s590 = scalar_lea.sflag [#allocation3], %s589
        %s591 = sand.u32 %s114, 1
        %s592 = smul.addr %s591, 48
        %s593 = scalar_lea.vmem [#allocation2], %s592
        %s594 = sand.u32 %s142, 1
        %s595 = scalar_lea.sflag [#allocation5], %s594
        %s596 = sand.u32 %s142, 1
        %s597 = smul.addr %s596, 48
        %s598 = scalar_lea.vmem [#allocation4], %s597
        // Predicated region
        $region33: #{tpu_custom_call.1} parent=31 // pred_check
          %p599 = pneg %p124
        $region34: #{tpu_custom_call.1} parent=31 // pred_check_branch
          %601 = sbr.rel (%p599) target = $region36
        $region35: #{tpu_custom_call.1} parent=31 // pred_region
          %s602 = smul.u32 2, %s27
          %604 = vsyncadd %s590, 0
          %s605 = smul.addr %s26, 6
          %s606 = sadd.s32 %s602, %s605
          %s607 = smul.addr %s606, 8
          %s608 = scalar_lea.hbm %s3, %s607
          %s609 = sshll.u32 %s593, 4
          %s610 = int_to_ptr.vmem [resolvable:$true] %s609
          %s611 = sshll.u32 %s608, 4
          %s612 = int_to_ptr.hbm [resolvable:$true] %s611
          %617 = dma.vmem_to_hbm [thread:$0]  %s610, 768, %s612, %s590, 256, 256, 16
        $region36: #{tpu_custom_call.1} parent=31 // pred_fallthru
          _
        // Predicated region
        $region37: #{tpu_custom_call.1} parent=31 // pred_check
          %p618 = pneg %p152
        $region38: #{tpu_custom_call.1} parent=31 // pred_check_branch
          %620 = sbr.rel (%p618) target = $region40
        $region39: #{tpu_custom_call.1} parent=31 // pred_region
          %s621 = smul.u32 2, %s27
          %623 = vsyncadd %s595, 0
          %s624 = smul.addr %s26, 6
          %s625 = sadd.s32 %s621, %s624
          %s626 = smul.addr %s625, 8
          %s627 = scalar_lea.hbm %s4, %s626
          %s628 = sshll.u32 %s598, 4
          %s629 = int_to_ptr.vmem [resolvable:$true] %s628
          %s630 = sshll.u32 %s627, 4
          %s631 = int_to_ptr.hbm [resolvable:$true] %s630
          %636 = dma.vmem_to_hbm [thread:$0]  %s629, 768, %s631, %s595, 256, 256, 16
        $region40: #{tpu_custom_call.1} parent=31 // pred_fallthru
          _
      $region32: #{tpu_custom_call.1} parent=5 // pred_fallthru
        _
      %p637 = scmp.le.s32.totalorder 2, %s17
      // Predicated region
      $region41: #{tpu_custom_call.1} parent=5 // pred_check
        %p638 = pneg %p637
      $region42: #{tpu_custom_call.1} parent=5 // pred_check_branch
        %640 = sbr.rel (%p638) target = $region44
      $region43: #{tpu_custom_call.1} parent=5 // pred_region
        %s641 = ssub.s32 %s17, 2
        // Predicated region
        $region45: #{tpu_custom_call.1} parent=43 // pred_check
          %p642 = pneg %p130
        $region46: #{tpu_custom_call.1} parent=43 // pred_check_branch
          %644 = sbr.rel (%p642) target = $region48
        $region47: #{tpu_custom_call.1} parent=43 // pred_region
          %s645 = sand.u32 %s115, 1
          %s646 = scalar_lea.sflag [#allocation3], %s645
          %s647 = sand.u32 %s115, 1
          %s648 = smul.addr %s647, 48
          %s649 = scalar_lea.vmem [#allocation2], %s648
          %651 = dma.done %s646, 768
        $region48: #{tpu_custom_call.1} parent=43 // pred_fallthru
          _
        // Predicated region
        $region49: #{tpu_custom_call.1} parent=43 // pred_check
          %p652 = pneg %p158
        $region50: #{tpu_custom_call.1} parent=43 // pred_check_branch
          %654 = sbr.rel (%p652) target = $region52
        $region51: #{tpu_custom_call.1} parent=43 // pred_region
          %s655 = sand.u32 %s143, 1
          %s656 = scalar_lea.sflag [#allocation5], %s655
          %s657 = sand.u32 %s143, 1
          %s658 = smul.addr %s657, 48
          %s659 = scalar_lea.vmem [#allocation4], %s658
          %661 = dma.done %s656, 768
        $region52: #{tpu_custom_call.1} parent=43 // pred_fallthru
          _
      $region44: #{tpu_custom_call.1} parent=5 // pred_fallthru
        _
    $region6: #{tpu_custom_call.1} parent=1 // loop_footer
      %s21 = sadd.s32 1, %s17
    $region7: #{tpu_custom_call.1} parent=1 // loop_footer_branch
      %16 = sbr.rel target = $region3
    $region8: #{tpu_custom_call.1} parent=1 // loop_exit
      _
    %662 = vsyncpa [#allocation3], 1
    %s663 = scalar_lea.sflag [#allocation3], 1
    %664 = vsyncpa %s663, 1
    %665 = vsyncpa [#allocation5], 1
    %s666 = scalar_lea.sflag [#allocation5], 1
    %667 = vsyncpa %s666, 1

</llo_original>
